<compile_context>
chip_gen: v6e
topology: v6e:2x2x1
jax: 0.10.0
libtpu: 0.0.40
codegen_flags: <defaults>
</compile_context>

<pallas_src>
import functools

import jax
import jax.numpy as jnp
from jax import lax
from jax.experimental import pallas as pl
from jax.experimental.pallas import tpu as pltpu


# ----------------------- Kernel A: build adapted weight -----------------------

def build_weight_kernel(scale_ref, w1a_ref, w1b_ref, w2a_ref, w2b_ref,
                        ow_ref, w_ref):
    # scale_ref : SMEM (1,)   combined scale = (alpha/lora_dim) * scalar * multiplier
    # w1a_ref   : (r, N)      hada_w1_a^T (lane-dense, grid-invariant, tiny)
    # w1b_ref   : (r, tk)     hada_w1_b K-slab
    # w2a_ref   : (r, N)      hada_w2_a^T
    # w2b_ref   : (r, tk)     hada_w2_b K-slab
    # ow_ref    : (N, tk)     original weight K-slab (f32, streamed, never resident)
    # w_ref     : (N, tk)     adapted weight output slab (mm_dtype, e.g. bf16)
    s = scale_ref[0]
    # Fold the scalar scale into the rank-r operand (N*r mults, not N*K).
    d1 = lax.dot_general(w1a_ref[...] * s, w1b_ref[...],
                         (((0,), (0,)), ((), ())),
                         preferred_element_type=jnp.float32)        # (N, tk)
    d2 = lax.dot_general(w2a_ref[...], w2b_ref[...],
                         (((0,), (0,)), ((), ())),
                         preferred_element_type=jnp.float32)        # (N, tk)
    # Hadamard + add kept in f32 (v5e VPU has no bf16); single cast on store.
    w_ref[...] = (ow_ref[...] + d1 * d2).astype(w_ref.dtype)


# ----------------------- Kernel B: y = x @ W^T + bias -------------------------

def linear_kernel(x_ref, w_ref, b_ref, o_ref, *, mm_dtype):
    # x_ref : (tm, K)  input rows tile (native dtype; cast to mm_dtype in VMEM)
    # w_ref : (tn, K)  adapted weight tile (mm_dtype)
    # b_ref : (1, tn)  bias (f32)
    # o_ref : (tm, tn) output tile
    # NT matmul: contract on K directly, no W^T materialization.
    y = lax.dot_general(x_ref[...].astype(mm_dtype), w_ref[...],
                        (((1,), (1,)), ((), ())),
                        preferred_element_type=jnp.float32)         # (tm, tn)
    o_ref[...] = (y + b_ref[...]).astype(o_ref.dtype)


# --------------------------------- helpers ------------------------------------

def _device_kind():
    try:
        return jax.devices()[0].device_kind.lower()
    except Exception:
        return ""


def _default_tile_m():
    kind = _device_kind()
    # v5e MXU is 128-wide; v6e/v7x MXUs are 256-wide, so a 256-row tile fills
    # the array in M and halves per-step grid overhead.
    if "v5 lite" in kind or "v5e" in kind or "v5litepod" in kind:
        return 128
    return 256


def _vmem_limit_bytes(needed_bytes):
    """Return a vmem_limit_bytes value, or None to keep the compiler default."""
    if needed_bytes <= 24 * 1024 * 1024:
        return None                       # comfortably inside the default limit
    try:
        cap = int(pltpu.get_tpu_info().vmem_capacity_bytes)
    except Exception:
        cap = 64 * 1024 * 1024            # v7x per-TensorCore (most restrictive)
    # Leave headroom for compiler-internal scratch / semaphores.
    return max(16 * 1024 * 1024,
               min(int(needed_bytes * 5 // 4), cap - 12 * 1024 * 1024))


# --------------------------------- wrappers -----------------------------------

def loha_build_weight(w1a, w1b, w2a, w2b, org_w, scale_combined, *,
                      mm_dtype=jnp.bfloat16, tk=512):
    """Adapted weight: org_w + (w1a@w1b)*(w2a@w2b)*scale, emitted in mm_dtype."""
    N, r = w1a.shape
    K = w1b.shape[1]
    tk = min(tk, K)
    num_k = pl.cdiv(K, tk)

    # Lane-dense rank factors: (N, r) -> (r, N) so the 128-lane axis carries N.
    w1a_t = jnp.transpose(w1a).astype(jnp.float32)
    w2a_t = jnp.transpose(w2a).astype(jnp.float32)
    scale_arr = jnp.asarray([scale_combined], dtype=jnp.float32)

    # Working-set estimate: double-buffered slabs + f32 d1/d2/add temporaries.
    needed = (2 * (N * tk * 4 + N * tk * 2 + 2 * r * tk * 4 + 2 * r * N * 4)
              + 3 * N * tk * 4)

    return pl.pallas_call(
        build_weight_kernel,
        out_shape=jax.ShapeDtypeStruct((N, K), mm_dtype),
        grid_spec=pltpu.PrefetchScalarGridSpec(
            num_scalar_prefetch=0,
            grid=(num_k,),
            in_specs=[
                pl.BlockSpec(memory_space=pltpu.MemorySpace.SMEM),  # scale
                pl.BlockSpec((r, N), lambda k: (0, 0)),             # w1a^T (tiny, invariant)
                pl.BlockSpec((r, tk), lambda k: (0, k)),            # w1b slab
                pl.BlockSpec((r, N), lambda k: (0, 0)),             # w2a^T (tiny, invariant)
                pl.BlockSpec((r, tk), lambda k: (0, k)),            # w2b slab
                pl.BlockSpec((N, tk), lambda k: (0, k)),            # org weight slab
            ],
            out_specs=pl.BlockSpec((N, tk), lambda k: (0, k)),
        ),
        compiler_params=pltpu.CompilerParams(
            dimension_semantics=("parallel",),        # K slabs are independent
            vmem_limit_bytes=_vmem_limit_bytes(needed),
        ),
    )(scale_arr, w1a_t, w1b.astype(jnp.float32), w2a_t,
      w2b.astype(jnp.float32), org_w.astype(jnp.float32))


def loha_linear(x, w1a, w1b, w2a, w2b, org_w, bias, scale_combined, *,
                mm_dtype=jnp.bfloat16, tm=None, tn=512, tk=512, out_dtype=None):
    """LoHa Linear forward: y = x @ (org_w + delta_w)^T + bias.

    x: (M, K); w1a/w2a: (N, r); w1b/w2b: (r, K); org_w: (N, K); bias: (N,).
    """
    M, K = x.shape
    N = org_w.shape[0]
    out_dtype = x.dtype if out_dtype is None else out_dtype

    # Step 1: build the adapted weight once (its own small pallas_call), so the
    # big matmul grid below has no init step and is fully "parallel".
    w_adapted = loha_build_weight(w1a, w1b, w2a, w2b, org_w, scale_combined,
                                  mm_dtype=mm_dtype, tk=tk)

    if tm is None:
        tm = _default_tile_m()
    tm = min(tm, M)                    # full-dim block is always legal
    tn = min(tn, N)
    num_m = pl.cdiv(M, tm)             # ragged M: last block is masked on store
    num_n = pl.cdiv(N, tn)

    bias2d = bias.reshape(1, N).astype(jnp.float32)

    x_bytes = jnp.dtype(x.dtype).itemsize
    w_bytes = jnp.dtype(mm_dtype).itemsize
    o_bytes = jnp.dtype(out_dtype).itemsize
    needed = (2 * tm * K * x_bytes + 2 * tn * K * w_bytes + 2 * tn * 4
              + 2 * tm * tn * o_bytes + 2 * tm * tn * 4)

    kern = functools.partial(linear_kernel, mm_dtype=mm_dtype)
    out = pl.pallas_call(
        kern,
        out_shape=jax.ShapeDtypeStruct((M, N), out_dtype),
        grid_spec=pltpu.PrefetchScalarGridSpec(
            num_scalar_prefetch=0,
            # n outer / m inner: the adapted-weight tile is DMA'd once per
            # n-tile (index unchanged across inner steps -> copy skipped).
            grid=(num_n, num_m),
            in_specs=[
                pl.BlockSpec((tm, K), lambda n, m: (m, 0)),   # x rows tile
                pl.BlockSpec((tn, K), lambda n, m: (n, 0)),   # adapted weight tile
                pl.BlockSpec((1, tn), lambda n, m: (0, n)),   # bias tile
            ],
            out_specs=pl.BlockSpec((tm, tn), lambda n, m: (m, n)),
        ),
        compiler_params=pltpu.CompilerParams(
            # No cross-step dependency anywhere -> both axes parallel
            # (megacore sharding on v7x; no-op on v5e/v6e).
            dimension_semantics=("parallel", "parallel"),
            vmem_limit_bytes=_vmem_limit_bytes(needed),
        ),
    )(x, w_adapted, bias2d)
    return out


if __name__ == "__main__":
    # Module configuration (Linear org_module)
    in_features = 256
    out_features = 128
    lora_dim = 4
    alpha = 1.0
    multiplier = 1.0
    scale = alpha / lora_dim          # LohaModule.scale
    scalar = 1.0                      # nn.Parameter init is 0.0; set to 1.0 as
                                      # load_weight_hook does, so the LoHa path is exercised.
    scale_combined = scale * scalar * multiplier

    M = 500                           # ragged batch on purpose (not a tile multiple)

    key = jax.random.PRNGKey(0)
    k = jax.random.split(key, 8)

    # Deterministic parameter init, matching LohaModule.__init__ std's.
    hada_w1_a = 0.1 * jax.random.normal(k[0], (out_features, lora_dim), jnp.float32)
    hada_w1_b = 1.0 * jax.random.normal(k[1], (lora_dim, in_features), jnp.float32)
    hada_w2_a = 0.1 * jax.random.normal(k[2], (out_features, lora_dim), jnp.float32)
    hada_w2_b = 1.0 * jax.random.normal(k[3], (lora_dim, in_features), jnp.float32)

    # Original Linear weights (deterministic synthetic values).
    org_weight = 0.02 * jax.random.normal(k[4], (out_features, in_features), jnp.float32)
    org_bias = 0.02 * jax.random.normal(k[5], (out_features,), jnp.float32)

    # Input
    x = jax.random.normal(k[6], (M, in_features), jnp.float32)

    # Pallas kernels
    y = loha_linear(x, hada_w1_a, hada_w1_b, hada_w2_a, hada_w2_b,
                    org_weight, org_bias, scale_combined)
    y = jax.block_until_ready(y)

    # Pure-JAX f32 reference of the torch forward pass.
    delta_w = (hada_w1_a @ hada_w1_b) * (hada_w2_a @ hada_w2_b) * scale
    w_ref = org_weight + delta_w * scalar * multiplier
    y_ref = x @ w_ref.T + org_bias

    assert y.shape == (M, out_features)
    # bf16 adapted weight + bf16 x on the MXU (f32 accumulation) -> loosened
    # tolerance vs the f32 reference.  Pass mm_dtype=jnp.float32 for tighter
    # fidelity at 2x the weight traffic.
    assert jnp.allclose(y, y_ref, atol=3e-2, rtol=3e-2), \
        f"max err {jnp.max(jnp.abs(y - y_ref))}"

    print("KERNEL_OK")
</pallas_src>

<mosaic_0001>
module attributes {stable_mosaic.version = 11 : i64} {
  func.func @build_weight_kernel(%arg0: i32, %arg1: memref<1xf32, #tpu.memory_space<smem>>, %arg2: memref<4x128xf32, #tpu.memory_space<vmem>>, %arg3: memref<4x256xf32, #tpu.memory_space<vmem>>, %arg4: memref<4x128xf32, #tpu.memory_space<vmem>>, %arg5: memref<4x256xf32, #tpu.memory_space<vmem>>, %arg6: memref<128x256xf32, #tpu.memory_space<vmem>>, %arg7: memref<128x256xbf16, #tpu.memory_space<vmem>>) attributes {dimension_semantics = [#tpu.dimension_semantics<parallel>], iteration_bounds = array<i64: 1>, scalar_prefetch = 0 : i64, scratch_operands = 0 : i64, tpu.core_type = #tpu.core_type<tc>, window_params = [{transform_indices = @transform_0, window_bounds = array<i64: 1>}, {pipeline_mode = #tpu.pipeline_mode<synchronous>, transform_indices = @transform_1, window_bounds = array<i64: 4, 128>}, {transform_indices = @transform_2, window_bounds = array<i64: 4, 256>}, {pipeline_mode = #tpu.pipeline_mode<synchronous>, transform_indices = @transform_3, window_bounds = array<i64: 4, 128>}, {transform_indices = @transform_4, window_bounds = array<i64: 4, 256>}, {transform_indices = @transform_5, window_bounds = array<i64: 128, 256>}, {transform_indices = @transform_6, window_bounds = array<i64: 128, 256>}]} {
    %c0 = arith.constant 0 : index
    %0 = memref.load %arg1[%c0] : memref<1xf32, #tpu.memory_space<smem>>
    %c0_0 = arith.constant 0 : index
    %c0_1 = arith.constant 0 : index
    %1 = vector.load %arg2[%c0_0, %c0_1] : memref<4x128xf32, #tpu.memory_space<vmem>>, vector<4x128xf32>
    %2 = vector.broadcast %0 : f32 to vector<4x128xf32>
    %3 = arith.mulf %1, %2 : vector<4x128xf32>
    %c0_2 = arith.constant 0 : index
    %c0_3 = arith.constant 0 : index
    %4 = vector.load %arg3[%c0_2, %c0_3] : memref<4x256xf32, #tpu.memory_space<vmem>>, vector<4x256xf32>
    %cst = arith.constant dense<0.000000e+00> : vector<128x256xf32>
    %5 = tpu.matmul %3, %4, %cst {dimension_numbers = #tpu.dot_dimension_numbers<[0], [0], [1], [1], [0, 1, 1, 1], [], []>} : vector<4x128xf32>, vector<4x256xf32>, vector<128x256xf32> -> vector<128x256xf32>
    %c0_4 = arith.constant 0 : index
    %c0_5 = arith.constant 0 : index
    %6 = vector.load %arg4[%c0_4, %c0_5] : memref<4x128xf32, #tpu.memory_space<vmem>>, vector<4x128xf32>
    %c0_6 = arith.constant 0 : index
    %c0_7 = arith.constant 0 : index
    %7 = vector.load %arg5[%c0_6, %c0_7] : memref<4x256xf32, #tpu.memory_space<vmem>>, vector<4x256xf32>
    %cst_8 = arith.constant dense<0.000000e+00> : vector<128x256xf32>
    %8 = tpu.matmul %6, %7, %cst_8 {dimension_numbers = #tpu.dot_dimension_numbers<[0], [0], [1], [1], [0, 1, 1, 1], [], []>} : vector<4x128xf32>, vector<4x256xf32>, vector<128x256xf32> -> vector<128x256xf32>
    %c0_9 = arith.constant 0 : index
    %c0_10 = arith.constant 0 : index
    %9 = vector.load %arg6[%c0_9, %c0_10] : memref<128x256xf32, #tpu.memory_space<vmem>>, vector<128x256xf32>
    %10 = arith.mulf %5, %8 : vector<128x256xf32>
    %11 = arith.addf %9, %10 : vector<128x256xf32>
    %12 = arith.truncf %11 : vector<128x256xf32> to vector<128x256xbf16>
    %c0_11 = arith.constant 0 : index
    %c0_12 = arith.constant 0 : index
    %13 = vector.load %arg7[%c0_11, %c0_12] : memref<128x256xbf16, #tpu.memory_space<vmem>>, vector<128x256xbf16>
    tpu.vector_store %arg7[%c0_11, %c0_12], %12 {strides = array<i32>} : memref<128x256xbf16, #tpu.memory_space<vmem>>, vector<128x256xbf16>,
    return
  }
  func.func @transform_0(%arg0: i32) -> i32 {
    %c0_i32 = arith.constant 0 : i32
    %c0_i32_0 = arith.constant 0 : i32
    return %c0_i32 : i32
  }
  func.func @transform_1(%arg0: i32) -> (i32, i32) {
    %c0_i32 = arith.constant 0 : i32
    %c0_i32_0 = arith.constant 0 : i32
    %c0_i32_1 = arith.constant 0 : i32
    return %c0_i32, %c0_i32_0 : i32, i32
  }
  func.func @transform_2(%arg0: i32) -> (i32, i32) {
    %c0_i32 = arith.constant 0 : i32
    %c0_i32_0 = arith.constant 0 : i32
    return %c0_i32, %arg0 : i32, i32
  }
  func.func @transform_3(%arg0: i32) -> (i32, i32) {
    %c0_i32 = arith.constant 0 : i32
    %c0_i32_0 = arith.constant 0 : i32
    %c0_i32_1 = arith.constant 0 : i32
    return %c0_i32, %c0_i32_0 : i32, i32
  }
  func.func @transform_4(%arg0: i32) -> (i32, i32) {
    %c0_i32 = arith.constant 0 : i32
    %c0_i32_0 = arith.constant 0 : i32
    return %c0_i32, %arg0 : i32, i32
  }
  func.func @transform_5(%arg0: i32) -> (i32, i32) {
    %c0_i32 = arith.constant 0 : i32
    %c0_i32_0 = arith.constant 0 : i32
    return %c0_i32, %arg0 : i32, i32
  }
  func.func @transform_6(%arg0: i32) -> (i32, i32) {
    %c0_i32 = arith.constant 0 : i32
    %c0_i32_0 = arith.constant 0 : i32
    return %c0_i32, %arg0 : i32, i32
  }
}

</mosaic_0001>

<llo_original>
// kernel: tpu_custom_call.1
$region0: #{tpu_custom_call.1}
  #allocation0 [shape = 'u32[]', space=smem, size = 0x4, offset = 0x4, fixed_abs, tag = 'smem constant byte address 0x4 - core index']
  #allocation1 [shape = 'u32[144,128]{1,0:T(1,128)}', space=vmem, size = 0x12000, scoped, tag = 'internal scratch']
  #allocation2 [shape = 'f32[1]{0:T(128)S(6)}', space=smem, size = 0x200, scoped, tag = 'scoped memory for tpu_custom_call.1']
  %s0 = inlined_call_operand.<no memory space> [shape: f32[1], index: 0, kind: input, shape index: {}]
  %s1 = inlined_call_operand.hbm [shape: f32[4,128], index: 1, kind: input, shape index: {}]
  %s2 = inlined_call_operand.hbm [shape: f32[4,256], index: 2, kind: input, shape index: {}]
  %s3 = inlined_call_operand.vmem [shape: f32[4,128], index: 3, kind: input, shape index: {}]
  %s4 = inlined_call_operand.hbm [shape: f32[4,256], index: 4, kind: input, shape index: {}]
  %s5 = inlined_call_operand.hbm [shape: f32[128,256], index: 5, kind: input, shape index: {}]
  %s6 = inlined_call_operand.hbm [shape: bf16[128,256], index: 6, kind: output, shape index: {}]
  %s7 = sld [smem:[#allocation0]]
  $region50: #{tpu_custom_call.1} parent=0
    _
  %s9 = ssub.s32 1, %s7
  %s10 = scalar_select 0, %s9, %s7
  %11 = sst [smem:[#allocation2]] %s0
  $region1: #{tpu_custom_call.1} parent=0
    #allocation3 [shape = 'u8[2048]{0}', space=vmem, size = 0x800, scoped, tag = 'input window, operand 1, single buffered']
    #allocation4 [shape = 's32[1]{0}', space=sflag, size = 0x4, scoped, tag = 'scoped memory for tpu_custom_call.1']
    #allocation5 [shape = 's32[1]{0}', space=sflag, size = 0x4, scoped, tag = 'scoped memory for tpu_custom_call.1']
    #allocation6 [shape = 'u8[4096]{0}', space=vmem, size = 0x1000, scoped, tag = 'input window, operand 2, single buffered']
    #allocation7 [shape = 's32[1]{0}', space=sflag, size = 0x4, scoped, tag = 'scoped memory for tpu_custom_call.1']
    #allocation8 [shape = 'u8[4096]{0}', space=vmem, size = 0x1000, scoped, tag = 'input window, operand 4, single buffered']
    #allocation9 [shape = 'u8[131072]{0}', space=vmem, size = 0x20000, scoped, tag = 'input window, operand 5, single buffered']
    #allocation10 [shape = 's32[1]{0}', space=sflag, size = 0x4, scoped, tag = 'scoped memory for tpu_custom_call.1']
    #allocation11 [shape = 'u8[65536]{0}', space=vmem, size = 0x10000, scoped, tag = 'output window, operand 0, single buffered']
    %12 = vsyncpa [#allocation4], 0
    %13 = vsyncpa [#allocation7], 0
    %14 = vsyncpa [#allocation10], 0
    %15 = vsyncpa [#allocation5], 0
    // Predicated region
    $region2: #{tpu_custom_call.1} parent=1 // pred_check
      _
    $region3: #{tpu_custom_call.1} parent=1 // pred_check_branch
      %17 = sbr.rel (0) target = $region5
    $region4: #{tpu_custom_call.1} parent=1 // pred_region
      _
    $region5: #{tpu_custom_call.1} parent=1 // pred_fallthru
      _
    // Predicated region
    $region6: #{tpu_custom_call.1} parent=1 // pred_check
      _
    $region7: #{tpu_custom_call.1} parent=1 // pred_check_branch
      %19 = sbr.rel (0) target = $region9
    $region8: #{tpu_custom_call.1} parent=1 // pred_region
      %s21 = ssub.s32 64, 64
      %22 = vsyncadd [#allocation4], %s21
      %s24 = sshll.u32 [#allocation3], 4
      %s25 = int_to_ptr.vmem [resolvable:$true] %s24
      %27 = dma.hbm_to_vmem [thread:$0]  %s1, 64, %s25, [#allocation4]
    $region9: #{tpu_custom_call.1} parent=1 // pred_fallthru
      _
    // Predicated region
    $region10: #{tpu_custom_call.1} parent=1 // pred_check
      _
    $region11: #{tpu_custom_call.1} parent=1 // pred_check_branch
      %29 = sbr.rel (0) target = $region13
    $region12: #{tpu_custom_call.1} parent=1 // pred_region
      %s31 = ssub.s32 128, 128
      %32 = vsyncadd [#allocation7], %s31
      %s34 = sshll.u32 [#allocation6], 4
      %s35 = int_to_ptr.vmem [resolvable:$true] %s34
      %37 = dma.hbm_to_vmem [thread:$0]  %s2, 128, %s35, [#allocation7]
    $region13: #{tpu_custom_call.1} parent=1 // pred_fallthru
      _
    // Predicated region
    $region14: #{tpu_custom_call.1} parent=1 // pred_check
      _
    $region15: #{tpu_custom_call.1} parent=1 // pred_check_branch
      %39 = sbr.rel (0) target = $region17
    $region16: #{tpu_custom_call.1} parent=1 // pred_region
      _
    $region17: #{tpu_custom_call.1} parent=1 // pred_fallthru
      _
    // Predicated region
    $region18: #{tpu_custom_call.1} parent=1 // pred_check
      _
    $region19: #{tpu_custom_call.1} parent=1 // pred_check_branch
      %41 = sbr.rel (0) target = $region21
    $region20: #{tpu_custom_call.1} parent=1 // pred_region
      %s43 = ssub.s32 128, 128
      %44 = vsyncadd [#allocation7], %s43
      %s46 = sshll.u32 [#allocation8], 4
      %s47 = int_to_ptr.vmem [resolvable:$true] %s46
      %49 = dma.hbm_to_vmem [thread:$0]  %s4, 128, %s47, [#allocation7]
    $region21: #{tpu_custom_call.1} parent=1 // pred_fallthru
      _
    // Predicated region
    $region22: #{tpu_custom_call.1} parent=1 // pred_check
      _
    $region23: #{tpu_custom_call.1} parent=1 // pred_check_branch
      %51 = sbr.rel (0) target = $region25
    $region24: #{tpu_custom_call.1} parent=1 // pred_region
      %s53 = ssub.s32 4096, 4096
      %54 = vsyncadd [#allocation10], %s53
      %s55 = sshll.u32 [#allocation9], 4
      %s56 = int_to_ptr.vmem [resolvable:$true] %s55
      %61 = dma.hbm_to_vmem [thread:$0]  %s5, 4096, %s56, [#allocation10], 256, 256, 16
    $region25: #{tpu_custom_call.1} parent=1 // pred_fallthru
      _
    // Predicated region
    $region26: #{tpu_custom_call.1} parent=1 // pred_check
      _
    $region27: #{tpu_custom_call.1} parent=1 // pred_check_branch
      %63 = sbr.rel (0) target = $region29
    $region28: #{tpu_custom_call.1} parent=1 // pred_region
      %64 = dma.done [#allocation4], 64
    $region29: #{tpu_custom_call.1} parent=1 // pred_fallthru
      _
    // Predicated region
    $region30: #{tpu_custom_call.1} parent=1 // pred_check
      _
    $region31: #{tpu_custom_call.1} parent=1 // pred_check_branch
      %66 = sbr.rel (0) target = $region33
    $region32: #{tpu_custom_call.1} parent=1 // pred_region
      %67 = dma.done [#allocation7], 128
    $region33: #{tpu_custom_call.1} parent=1 // pred_fallthru
      _
    // Predicated region
    $region34: #{tpu_custom_call.1} parent=1 // pred_check
      _
    $region35: #{tpu_custom_call.1} parent=1 // pred_check_branch
      %69 = sbr.rel (0) target = $region37
    $region36: #{tpu_custom_call.1} parent=1 // pred_region
      %70 = dma.done [#allocation7], 128
    $region37: #{tpu_custom_call.1} parent=1 // pred_fallthru
      _
    // Predicated region
    $region38: #{tpu_custom_call.1} parent=1 // pred_check
      _
    $region39: #{tpu_custom_call.1} parent=1 // pred_check_branch
      %72 = sbr.rel (0) target = $region41
    $region40: #{tpu_custom_call.1} parent=1 // pred_region
      %73 = dma.done [#allocation10], 4096
    $region41: #{tpu_custom_call.1} parent=1 // pred_fallthru
      _
    %s74 = sld [smem:[#allocation2]]
    %v75 = vld [vmem:[#allocation3] sm:$0xf]
    %v76 = vstv %s74
    %v77 = vmul.f32 %v75, %v76
    %v78 = vld [vmem:[#allocation6] sm:$0xff]
    %79 = vxpose.xlu0.b32.start [1/16] %v77, 128
    %80 = vxpose.xlu0.b32.cont [2/16] 0.0, 128
    %81 = vxpose.xlu0.b32.cont [3/16] 0.0, 128
    %82 = vxpose.xlu0.b32.cont [4/16] 0.0, 128
    %83 = vxpose.xlu0.b32.cont [5/16] 0.0, 128
    %84 = vxpose.xlu0.b32.cont [6/16] 0.0, 128
    %85 = vxpose.xlu0.b32.cont [7/16] 0.0, 128
    %86 = vxpose.xlu0.b32.cont [8/16] 0.0, 128
    %87 = vxpose.xlu0.b32.cont [9/16] 0.0, 128
    %88 = vxpose.xlu0.b32.cont [10/16] 0.0, 128
    %89 = vxpose.xlu0.b32.cont [11/16] 0.0, 128
    %90 = vxpose.xlu0.b32.cont [12/16] 0.0, 128
    %91 = vxpose.xlu0.b32.cont [13/16] 0.0, 128
    %92 = vxpose.xlu0.b32.cont [14/16] 0.0, 128
    %93 = vxpose.xlu0.b32.cont [15/16] 0.0, 128
    %94 = vxpose.xlu0.b32.end [16/16] 0.0, 128
    %v95 = vpop.trf.xlu0
    %v96 = vpop.trf.xlu0
    %v97 = vpop.trf.xlu0
    %v98 = vpop.trf.xlu0
    %v99 = vpop.trf.xlu0
    %v100 = vpop.trf.xlu0
    %v101 = vpop.trf.xlu0
    %v102 = vpop.trf.xlu0
    %v103 = vpop.trf.xlu0
    %v104 = vpop.trf.xlu0
    %v105 = vpop.trf.xlu0
    %v106 = vpop.trf.xlu0
    %v107 = vpop.trf.xlu0
    %v108 = vpop.trf.xlu0
    %v109 = vpop.trf.xlu0
    %v110 = vpop.trf.xlu0
    %v112 = vcombine.high %v78, %v78
    %vm113 = vcmask 31744
    %v115 = vsel %vm113, %v95, 0
    %v118 = vsel %vm113, %v96, 0
    %v121 = vsel %vm113, %v97, 0
    %v124 = vsel %vm113, %v98, 0
    %v127 = vsel %vm113, %v99, 0
    %v130 = vsel %vm113, %v100, 0
    %v133 = vsel %vm113, %v101, 0
    %v136 = vsel %vm113, %v102, 0
    %v139 = vsel %vm113, %v103, 0
    %v142 = vsel %vm113, %v104, 0
    %v145 = vsel %vm113, %v105, 0
    %v148 = vsel %vm113, %v106, 0
    %v151 = vsel %vm113, %v107, 0
    %v154 = vsel %vm113, %v108, 0
    %v157 = vsel %vm113, %v109, 0
    %v160 = vsel %vm113, %v110, 0
    %vm162 = vcmask 1043456
    %v163 = vsel %vm162, %v78, 0
    %v165 = vsel %vm162, %v112, 0
    %167 = vmatprep.subr.mxu0 0.0
    %168 = vmatpush1.msra.mxu0 0.0
    %169 = vmatprep.subr.mxu0 0.0
    %170 = vmatpush1.msra.mxu0 0.0
    %171 = vmatprep.subr.mxu0 0.0
    %172 = vmatpush1.msra.mxu0 0.0
    %173 = vmatprep.subr.mxu0 0.0
    %174 = vmatpush1.msra.mxu0 0.0
    %175 = vmatprep.subr.mxu0 0.0
    %176 = vmatpush1.msra.mxu0 0.0
    %177 = vmatprep.subr.mxu0 0.0
    %178 = vmatpush1.msra.mxu0 0.0
    %179 = vmatprep.subr.mxu0 0.0
    %180 = vmatpush1.msra.mxu0 0.0
    %181 = vmatprep.subr.mxu0 0.0
    %182 = vmatpush1.msra.mxu0 0.0
    %183 = vmatprep.subr.mxu0 0.0
    %184 = vmatpush1.msra.mxu0 0.0
    %185 = vmatprep.subr.mxu0 0.0
    %186 = vmatpush1.msra.mxu0 0.0
    %187 = vmatprep.subr.mxu0 0.0
    %188 = vmatpush1.msra.mxu0 0.0
    %189 = vmatprep.subr.mxu0 0.0
    %190 = vmatpush1.msra.mxu0 0.0
    %191 = vmatprep.subr.mxu0 0.0
    %192 = vmatpush1.msra.mxu0 0.0
    %193 = vmatprep.subr.mxu0 0.0
    %194 = vmatpush1.msra.mxu0 0.0
    %195 = vmatprep.subr.mxu0 0.0
    %196 = vmatpush1.msra.mxu0 0.0
    %197 = vmatprep.subr.mxu0 %v165
    %198 = vmatpush1.msra.mxu0 %v163
    %199 = vmatprep.subr.mxu0 0.0
    %200 = vmatpush2.msra.mxu0 0.0
    %201 = vmatprep.subr.mxu0 0.0
    %202 = vmatpush2.msra.mxu0 0.0
    %203 = vmatprep.subr.mxu0 0.0
    %204 = vmatpush2.msra.mxu0 0.0
    %205 = vmatprep.subr.mxu0 0.0
    %206 = vmatpush2.msra.mxu0 0.0
    %207 = vmatprep.subr.mxu0 0.0
    %208 = vmatpush2.msra.mxu0 0.0
    %209 = vmatprep.subr.mxu0 0.0
    %210 = vmatpush2.msra.mxu0 0.0
    %211 = vmatprep.subr.mxu0 0.0
    %212 = vmatpush2.msra.mxu0 0.0
    %213 = vmatprep.subr.mxu0 0.0
    %214 = vmatpush2.msra.mxu0 0.0
    %215 = vmatprep.subr.mxu0 0.0
    %216 = vmatpush2.msra.mxu0 0.0
    %217 = vmatprep.subr.mxu0 0.0
    %218 = vmatpush2.msra.mxu0 0.0
    %219 = vmatprep.subr.mxu0 0.0
    %220 = vmatpush2.msra.mxu0 0.0
    %221 = vmatprep.subr.mxu0 0.0
    %222 = vmatpush2.msra.mxu0 0.0
    %223 = vmatprep.subr.mxu0 0.0
    %224 = vmatpush2.msra.mxu0 0.0
    %225 = vmatprep.subr.mxu0 0.0
    %226 = vmatpush2.msra.mxu0 0.0
    %227 = vmatprep.subr.mxu0 0.0
    %228 = vmatpush2.msra.mxu0 0.0
    %229 = vmatprep.subr.mxu0 0.0
    %230 = vmatpush2.msra.mxu0 0.0
    %231 = vmatprep.mubr.f32.mxu0 0.0
    %232 = vmatmul.mubr.f32.gmra.mxu0 %v115
    %v233 = vpop.f32.mrf.mxu0
    %v234 = vadd.f32 0.0, %v233
    %v235 = vpop.f32.mrf.mxu0
    %v236 = vadd.f32 0.0, %v235
    %237 = vmatprep.mubr.f32.mxu0 0.0
    %238 = vmatmul.mubr.f32.gmra.mxu0 %v118
    %v239 = vpop.f32.mrf.mxu0
    %v240 = vadd.f32 0.0, %v239
    %v241 = vpop.f32.mrf.mxu0
    %v242 = vadd.f32 0.0, %v241
    %243 = vmatprep.mubr.f32.mxu0 0.0
    %244 = vmatmul.mubr.f32.gmra.mxu0 %v121
    %v245 = vpop.f32.mrf.mxu0
    %v246 = vadd.f32 0.0, %v245
    %v247 = vpop.f32.mrf.mxu0
    %v248 = vadd.f32 0.0, %v247
    %249 = vmatprep.mubr.f32.mxu0 0.0
    %250 = vmatmul.mubr.f32.gmra.mxu0 %v124
    %v251 = vpop.f32.mrf.mxu0
    %v252 = vadd.f32 0.0, %v251
    %v253 = vpop.f32.mrf.mxu0
    %v254 = vadd.f32 0.0, %v253
    %255 = vmatprep.mubr.f32.mxu0 0.0
    %256 = vmatmul.mubr.f32.gmra.mxu0 %v127
    %v257 = vpop.f32.mrf.mxu0
    %v258 = vadd.f32 0.0, %v257
    %v259 = vpop.f32.mrf.mxu0
    %v260 = vadd.f32 0.0, %v259
    %261 = vmatprep.mubr.f32.mxu0 0.0
    %262 = vmatmul.mubr.f32.gmra.mxu0 %v130
    %v263 = vpop.f32.mrf.mxu0
    %v264 = vadd.f32 0.0, %v263
    %v265 = vpop.f32.mrf.mxu0
    %v266 = vadd.f32 0.0, %v265
    %267 = vmatprep.mubr.f32.mxu0 0.0
    %268 = vmatmul.mubr.f32.gmra.mxu0 %v133
    %v269 = vpop.f32.mrf.mxu0
    %v270 = vadd.f32 0.0, %v269
    %v271 = vpop.f32.mrf.mxu0
    %v272 = vadd.f32 0.0, %v271
    %273 = vmatprep.mubr.f32.mxu0 0.0
    %274 = vmatmul.mubr.f32.gmra.mxu0 %v136
    %v275 = vpop.f32.mrf.mxu0
    %v276 = vadd.f32 0.0, %v275
    %v277 = vpop.f32.mrf.mxu0
    %v278 = vadd.f32 0.0, %v277
    %279 = vmatprep.mubr.f32.mxu0 0.0
    %280 = vmatmul.mubr.f32.gmra.mxu0 %v139
    %v281 = vpop.f32.mrf.mxu0
    %v282 = vadd.f32 0.0, %v281
    %v283 = vpop.f32.mrf.mxu0
    %v284 = vadd.f32 0.0, %v283
    %285 = vmatprep.mubr.f32.mxu0 0.0
    %286 = vmatmul.mubr.f32.gmra.mxu0 %v142
    %v287 = vpop.f32.mrf.mxu0
    %v288 = vadd.f32 0.0, %v287
    %v289 = vpop.f32.mrf.mxu0
    %v290 = vadd.f32 0.0, %v289
    %291 = vmatprep.mubr.f32.mxu0 0.0
    %292 = vmatmul.mubr.f32.gmra.mxu0 %v145
    %v293 = vpop.f32.mrf.mxu0
    %v294 = vadd.f32 0.0, %v293
    %v295 = vpop.f32.mrf.mxu0
    %v296 = vadd.f32 0.0, %v295
    %297 = vmatprep.mubr.f32.mxu0 0.0
    %298 = vmatmul.mubr.f32.gmra.mxu0 %v148
    %v299 = vpop.f32.mrf.mxu0
    %v300 = vadd.f32 0.0, %v299
    %v301 = vpop.f32.mrf.mxu0
    %v302 = vadd.f32 0.0, %v301
    %303 = vmatprep.mubr.f32.mxu0 0.0
    %304 = vmatmul.mubr.f32.gmra.mxu0 %v151
    %v305 = vpop.f32.mrf.mxu0
    %v306 = vadd.f32 0.0, %v305
    %v307 = vpop.f32.mrf.mxu0
    %v308 = vadd.f32 0.0, %v307
    %309 = vmatprep.mubr.f32.mxu0 0.0
    %310 = vmatmul.mubr.f32.gmra.mxu0 %v154
    %v311 = vpop.f32.mrf.mxu0
    %v312 = vadd.f32 0.0, %v311
    %v313 = vpop.f32.mrf.mxu0
    %v314 = vadd.f32 0.0, %v313
    %315 = vmatprep.mubr.f32.mxu0 0.0
    %316 = vmatmul.mubr.f32.gmra.mxu0 %v157
    %v317 = vpop.f32.mrf.mxu0
    %v318 = vadd.f32 0.0, %v317
    %v319 = vpop.f32.mrf.mxu0
    %v320 = vadd.f32 0.0, %v319
    %321 = vmatprep.mubr.f32.mxu0 0.0
    %322 = vmatmul.mubr.f32.gmra.mxu0 %v160
    %v323 = vpop.f32.mrf.mxu0
    %v324 = vadd.f32 0.0, %v323
    %v325 = vpop.f32.mrf.mxu0
    %v326 = vadd.f32 0.0, %v325
    %327 = vdwg.mxu0
    %v328 = vld [vmem:[%s3] sm:$0xf]
    %v329 = vld [vmem:[#allocation8] sm:$0xff]
    %330 = vxpose.xlu0.b32.start [1/16] %v328, 128
    %331 = vxpose.xlu0.b32.cont [2/16] 0.0, 128
    %332 = vxpose.xlu0.b32.cont [3/16] 0.0, 128
    %333 = vxpose.xlu0.b32.cont [4/16] 0.0, 128
    %334 = vxpose.xlu0.b32.cont [5/16] 0.0, 128
    %335 = vxpose.xlu0.b32.cont [6/16] 0.0, 128
    %336 = vxpose.xlu0.b32.cont [7/16] 0.0, 128
    %337 = vxpose.xlu0.b32.cont [8/16] 0.0, 128
    %338 = vxpose.xlu0.b32.cont [9/16] 0.0, 128
    %339 = vxpose.xlu0.b32.cont [10/16] 0.0, 128
    %340 = vxpose.xlu0.b32.cont [11/16] 0.0, 128
    %341 = vxpose.xlu0.b32.cont [12/16] 0.0, 128
    %342 = vxpose.xlu0.b32.cont [13/16] 0.0, 128
    %343 = vxpose.xlu0.b32.cont [14/16] 0.0, 128
    %344 = vxpose.xlu0.b32.cont [15/16] 0.0, 128
    %345 = vxpose.xlu0.b32.end [16/16] 0.0, 128
    %v346 = vpop.trf.xlu0
    %v347 = vpop.trf.xlu0
    %v348 = vpop.trf.xlu0
    %v349 = vpop.trf.xlu0
    %v350 = vpop.trf.xlu0
    %v351 = vpop.trf.xlu0
    %v352 = vpop.trf.xlu0
    %v353 = vpop.trf.xlu0
    %v354 = vpop.trf.xlu0
    %v355 = vpop.trf.xlu0
    %v356 = vpop.trf.xlu0
    %v357 = vpop.trf.xlu0
    %v358 = vpop.trf.xlu0
    %v359 = vpop.trf.xlu0
    %v360 = vpop.trf.xlu0
    %v361 = vpop.trf.xlu0
    %v363 = vcombine.high %v329, %v329
    %v365 = vsel %vm113, %v346, 0
    %v368 = vsel %vm113, %v347, 0
    %v371 = vsel %vm113, %v348, 0
    %v374 = vsel %vm113, %v349, 0
    %v377 = vsel %vm113, %v350, 0
    %v380 = vsel %vm113, %v351, 0
    %v383 = vsel %vm113, %v352, 0
    %v386 = vsel %vm113, %v353, 0
    %v389 = vsel %vm113, %v354, 0
    %v392 = vsel %vm113, %v355, 0
    %v395 = vsel %vm113, %v356, 0
    %v398 = vsel %vm113, %v357, 0
    %v401 = vsel %vm113, %v358, 0
    %v404 = vsel %vm113, %v359, 0
    %v407 = vsel %vm113, %v360, 0
    %v410 = vsel %vm113, %v361, 0
    %v412 = vsel %vm162, %v329, 0
    %v414 = vsel %vm162, %v363, 0
    %416 = vmatprep.subr.mxu0 0.0
    %417 = vmatpush1.msra.mxu0 0.0
    %418 = vmatprep.subr.mxu0 0.0
    %419 = vmatpush1.msra.mxu0 0.0
    %420 = vmatprep.subr.mxu0 0.0
    %421 = vmatpush1.msra.mxu0 0.0
    %422 = vmatprep.subr.mxu0 0.0
    %423 = vmatpush1.msra.mxu0 0.0
    %424 = vmatprep.subr.mxu0 0.0
    %425 = vmatpush1.msra.mxu0 0.0
    %426 = vmatprep.subr.mxu0 0.0
    %427 = vmatpush1.msra.mxu0 0.0
    %428 = vmatprep.subr.mxu0 0.0
    %429 = vmatpush1.msra.mxu0 0.0
    %430 = vmatprep.subr.mxu0 0.0
    %431 = vmatpush1.msra.mxu0 0.0
    %432 = vmatprep.subr.mxu0 0.0
    %433 = vmatpush1.msra.mxu0 0.0
    %434 = vmatprep.subr.mxu0 0.0
    %435 = vmatpush1.msra.mxu0 0.0
    %436 = vmatprep.subr.mxu0 0.0
    %437 = vmatpush1.msra.mxu0 0.0
    %438 = vmatprep.subr.mxu0 0.0
    %439 = vmatpush1.msra.mxu0 0.0
    %440 = vmatprep.subr.mxu0 0.0
    %441 = vmatpush1.msra.mxu0 0.0
    %442 = vmatprep.subr.mxu0 0.0
    %443 = vmatpush1.msra.mxu0 0.0
    %444 = vmatprep.subr.mxu0 0.0
    %445 = vmatpush1.msra.mxu0 0.0
    %446 = vmatprep.subr.mxu0 %v414
    %447 = vmatpush1.msra.mxu0 %v412
    %448 = vmatprep.subr.mxu0 0.0
    %449 = vmatpush2.msra.mxu0 0.0
    %450 = vmatprep.subr.mxu0 0.0
    %451 = vmatpush2.msra.mxu0 0.0
    %452 = vmatprep.subr.mxu0 0.0
    %453 = vmatpush2.msra.mxu0 0.0
    %454 = vmatprep.subr.mxu0 0.0
    %455 = vmatpush2.msra.mxu0 0.0
    %456 = vmatprep.subr.mxu0 0.0
    %457 = vmatpush2.msra.mxu0 0.0
    %458 = vmatprep.subr.mxu0 0.0
    %459 = vmatpush2.msra.mxu0 0.0
    %460 = vmatprep.subr.mxu0 0.0
    %461 = vmatpush2.msra.mxu0 0.0
    %462 = vmatprep.subr.mxu0 0.0
    %463 = vmatpush2.msra.mxu0 0.0
    %464 = vmatprep.subr.mxu0 0.0
    %465 = vmatpush2.msra.mxu0 0.0
    %466 = vmatprep.subr.mxu0 0.0
    %467 = vmatpush2.msra.mxu0 0.0
    %468 = vmatprep.subr.mxu0 0.0
    %469 = vmatpush2.msra.mxu0 0.0
    %470 = vmatprep.subr.mxu0 0.0
    %471 = vmatpush2.msra.mxu0 0.0
    %472 = vmatprep.subr.mxu0 0.0
    %473 = vmatpush2.msra.mxu0 0.0
    %474 = vmatprep.subr.mxu0 0.0
    %475 = vmatpush2.msra.mxu0 0.0
    %476 = vmatprep.subr.mxu0 0.0
    %477 = vmatpush2.msra.mxu0 0.0
    %478 = vmatprep.subr.mxu0 0.0
    %479 = vmatpush2.msra.mxu0 0.0
    %480 = vmatprep.mubr.f32.mxu0 0.0
    %481 = vmatmul.mubr.f32.gmra.mxu0 %v365
    %v482 = vpop.f32.mrf.mxu0
    %v483 = vadd.f32 0.0, %v482
    %v484 = vpop.f32.mrf.mxu0
    %v485 = vadd.f32 0.0, %v484
    %486 = vmatprep.mubr.f32.mxu0 0.0
    %487 = vmatmul.mubr.f32.gmra.mxu0 %v368
    %v488 = vpop.f32.mrf.mxu0
    %v489 = vadd.f32 0.0, %v488
    %v490 = vpop.f32.mrf.mxu0
    %v491 = vadd.f32 0.0, %v490
    %492 = vmatprep.mubr.f32.mxu0 0.0
    %493 = vmatmul.mubr.f32.gmra.mxu0 %v371
    %v494 = vpop.f32.mrf.mxu0
    %v495 = vadd.f32 0.0, %v494
    %v496 = vpop.f32.mrf.mxu0
    %v497 = vadd.f32 0.0, %v496
    %498 = vmatprep.mubr.f32.mxu0 0.0
    %499 = vmatmul.mubr.f32.gmra.mxu0 %v374
    %v500 = vpop.f32.mrf.mxu0
    %v501 = vadd.f32 0.0, %v500
    %v502 = vpop.f32.mrf.mxu0
    %v503 = vadd.f32 0.0, %v502
    %504 = vmatprep.mubr.f32.mxu0 0.0
    %505 = vmatmul.mubr.f32.gmra.mxu0 %v377
    %v506 = vpop.f32.mrf.mxu0
    %v507 = vadd.f32 0.0, %v506
    %v508 = vpop.f32.mrf.mxu0
    %v509 = vadd.f32 0.0, %v508
    %510 = vmatprep.mubr.f32.mxu0 0.0
    %511 = vmatmul.mubr.f32.gmra.mxu0 %v380
    %v512 = vpop.f32.mrf.mxu0
    %v513 = vadd.f32 0.0, %v512
    %v514 = vpop.f32.mrf.mxu0
    %v515 = vadd.f32 0.0, %v514
    %516 = vmatprep.mubr.f32.mxu0 0.0
    %517 = vmatmul.mubr.f32.gmra.mxu0 %v383
    %v518 = vpop.f32.mrf.mxu0
    %v519 = vadd.f32 0.0, %v518
    %v520 = vpop.f32.mrf.mxu0
    %v521 = vadd.f32 0.0, %v520
    %522 = vmatprep.mubr.f32.mxu0 0.0
    %523 = vmatmul.mubr.f32.gmra.mxu0 %v386
    %v524 = vpop.f32.mrf.mxu0
    %v525 = vadd.f32 0.0, %v524
    %v526 = vpop.f32.mrf.mxu0
    %v527 = vadd.f32 0.0, %v526
    %528 = vmatprep.mubr.f32.mxu0 0.0
    %529 = vmatmul.mubr.f32.gmra.mxu0 %v389
    %v530 = vpop.f32.mrf.mxu0
    %v531 = vadd.f32 0.0, %v530
    %v532 = vpop.f32.mrf.mxu0
    %v533 = vadd.f32 0.0, %v532
    %534 = vmatprep.mubr.f32.mxu0 0.0
    %535 = vmatmul.mubr.f32.gmra.mxu0 %v392
    %v536 = vpop.f32.mrf.mxu0
    %v537 = vadd.f32 0.0, %v536
    %v538 = vpop.f32.mrf.mxu0
    %v539 = vadd.f32 0.0, %v538
    %540 = vmatprep.mubr.f32.mxu0 0.0
    %541 = vmatmul.mubr.f32.gmra.mxu0 %v395
    %v542 = vpop.f32.mrf.mxu0
    %v543 = vadd.f32 0.0, %v542
    %v544 = vpop.f32.mrf.mxu0
    %v545 = vadd.f32 0.0, %v544
    %546 = vmatprep.mubr.f32.mxu0 0.0
    %547 = vmatmul.mubr.f32.gmra.mxu0 %v398
    %v548 = vpop.f32.mrf.mxu0
    %v549 = vadd.f32 0.0, %v548
    %v550 = vpop.f32.mrf.mxu0
    %v551 = vadd.f32 0.0, %v550
    %552 = vmatprep.mubr.f32.mxu0 0.0
    %553 = vmatmul.mubr.f32.gmra.mxu0 %v401
    %v554 = vpop.f32.mrf.mxu0
    %v555 = vadd.f32 0.0, %v554
    %v556 = vpop.f32.mrf.mxu0
    %v557 = vadd.f32 0.0, %v556
    %558 = vmatprep.mubr.f32.mxu0 0.0
    %559 = vmatmul.mubr.f32.gmra.mxu0 %v404
    %v560 = vpop.f32.mrf.mxu0
    %v561 = vadd.f32 0.0, %v560
    %v562 = vpop.f32.mrf.mxu0
    %v563 = vadd.f32 0.0, %v562
    %564 = vmatprep.mubr.f32.mxu0 0.0
    %565 = vmatmul.mubr.f32.gmra.mxu0 %v407
    %v566 = vpop.f32.mrf.mxu0
    %v567 = vadd.f32 0.0, %v566
    %v568 = vpop.f32.mrf.mxu0
    %v569 = vadd.f32 0.0, %v568
    %570 = vmatprep.mubr.f32.mxu0 0.0
    %571 = vmatmul.mubr.f32.gmra.mxu0 %v410
    %v572 = vpop.f32.mrf.mxu0
    %v573 = vadd.f32 0.0, %v572
    %v574 = vpop.f32.mrf.mxu0
    %v575 = vadd.f32 0.0, %v574
    %576 = vdwg.mxu0
    %v577 = vld [vmem:[#allocation9] sm:$0xff]
    %v578 = vld [vmem:[#allocation9 + $0x8] sm:$0xff]
    %v579 = vld [vmem:[#allocation9 + $0x10] sm:$0xff]
    %v580 = vld [vmem:[#allocation9 + $0x18] sm:$0xff]
    %v581 = vld [vmem:[#allocation9 + $0x20] sm:$0xff]
    %v582 = vld [vmem:[#allocation9 + $0x28] sm:$0xff]
    %v583 = vld [vmem:[#allocation9 + $0x30] sm:$0xff]
    %v584 = vld [vmem:[#allocation9 + $0x38] sm:$0xff]
    %v585 = vld [vmem:[#allocation9 + $0x40] sm:$0xff]
    %v586 = vld [vmem:[#allocation9 + $0x48] sm:$0xff]
    %v587 = vld [vmem:[#allocation9 + $0x50] sm:$0xff]
    %v588 = vld [vmem:[#allocation9 + $0x58] sm:$0xff]
    %v589 = vld [vmem:[#allocation9 + $0x60] sm:$0xff]
    %v590 = vld [vmem:[#allocation9 + $0x68] sm:$0xff]
    %v591 = vld [vmem:[#allocation9 + $0x70] sm:$0xff]
    %v592 = vld [vmem:[#allocation9 + $0x78] sm:$0xff]
    %v593 = vld [vmem:[#allocation9 + $0x80] sm:$0xff]
    %v594 = vld [vmem:[#allocation9 + $0x88] sm:$0xff]
    %v595 = vld [vmem:[#allocation9 + $0x90] sm:$0xff]
    %v596 = vld [vmem:[#allocation9 + $0x98] sm:$0xff]
    %v597 = vld [vmem:[#allocation9 + $0xa0] sm:$0xff]
    %v598 = vld [vmem:[#allocation9 + $0xa8] sm:$0xff]
    %v599 = vld [vmem:[#allocation9 + $0xb0] sm:$0xff]
    %v600 = vld [vmem:[#allocation9 + $0xb8] sm:$0xff]
    %v601 = vld [vmem:[#allocation9 + $0xc0] sm:$0xff]
    %v602 = vld [vmem:[#allocation9 + $0xc8] sm:$0xff]
    %v603 = vld [vmem:[#allocation9 + $0xd0] sm:$0xff]
    %v604 = vld [vmem:[#allocation9 + $0xd8] sm:$0xff]
    %v605 = vld [vmem:[#allocation9 + $0xe0] sm:$0xff]
    %v606 = vld [vmem:[#allocation9 + $0xe8] sm:$0xff]
    %v607 = vld [vmem:[#allocation9 + $0xf0] sm:$0xff]
    %v608 = vld [vmem:[#allocation9 + $0xf8] sm:$0xff]
    %v609 = vmul.f32 %v234, %v483
    %v610 = vmul.f32 %v236, %v485
    %v611 = vmul.f32 %v240, %v489
    %v612 = vmul.f32 %v242, %v491
    %v613 = vmul.f32 %v246, %v495
    %v614 = vmul.f32 %v248, %v497
    %v615 = vmul.f32 %v252, %v501
    %v616 = vmul.f32 %v254, %v503
    %v617 = vmul.f32 %v258, %v507
    %v618 = vmul.f32 %v260, %v509
    %v619 = vmul.f32 %v264, %v513
    %v620 = vmul.f32 %v266, %v515
    %v621 = vmul.f32 %v270, %v519
    %v622 = vmul.f32 %v272, %v521
    %v623 = vmul.f32 %v276, %v525
    %v624 = vmul.f32 %v278, %v527
    %v625 = vmul.f32 %v282, %v531
    %v626 = vmul.f32 %v284, %v533
    %v627 = vmul.f32 %v288, %v537
    %v628 = vmul.f32 %v290, %v539
    %v629 = vmul.f32 %v294, %v543
    %v630 = vmul.f32 %v296, %v545
    %v631 = vmul.f32 %v300, %v549
    %v632 = vmul.f32 %v302, %v551
    %v633 = vmul.f32 %v306, %v555
    %v634 = vmul.f32 %v308, %v557
    %v635 = vmul.f32 %v312, %v561
    %v636 = vmul.f32 %v314, %v563
    %v637 = vmul.f32 %v318, %v567
    %v638 = vmul.f32 %v320, %v569
    %v639 = vmul.f32 %v324, %v573
    %v640 = vmul.f32 %v326, %v575
    %v641 = vadd.f32 %v577, %v609
    %v642 = vadd.f32 %v578, %v610
    %v643 = vadd.f32 %v579, %v611
    %v644 = vadd.f32 %v580, %v612
    %v645 = vadd.f32 %v581, %v613
    %v646 = vadd.f32 %v582, %v614
    %v647 = vadd.f32 %v583, %v615
    %v648 = vadd.f32 %v584, %v616
    %v649 = vadd.f32 %v585, %v617
    %v650 = vadd.f32 %v586, %v618
    %v651 = vadd.f32 %v587, %v619
    %v652 = vadd.f32 %v588, %v620
    %v653 = vadd.f32 %v589, %v621
    %v654 = vadd.f32 %v590, %v622
    %v655 = vadd.f32 %v591, %v623
    %v656 = vadd.f32 %v592, %v624
    %v657 = vadd.f32 %v593, %v625
    %v658 = vadd.f32 %v594, %v626
    %v659 = vadd.f32 %v595, %v627
    %v660 = vadd.f32 %v596, %v628
    %v661 = vadd.f32 %v597, %v629
    %v662 = vadd.f32 %v598, %v630
    %v663 = vadd.f32 %v599, %v631
    %v664 = vadd.f32 %v600, %v632
    %v665 = vadd.f32 %v601, %v633
    %v666 = vadd.f32 %v602, %v634
    %v667 = vadd.f32 %v603, %v635
    %v668 = vadd.f32 %v604, %v636
    %v669 = vadd.f32 %v605, %v637
    %v670 = vadd.f32 %v606, %v638
    %v671 = vadd.f32 %v607, %v639
    %v672 = vadd.f32 %v608, %v640
    %v673 = vpack.c.bf16 %v643, %v641
    %v674 = vpack.c.bf16 %v644, %v642
    %v675 = vpack.c.bf16 %v647, %v645
    %v676 = vpack.c.bf16 %v648, %v646
    %v677 = vpack.c.bf16 %v651, %v649
    %v678 = vpack.c.bf16 %v652, %v650
    %v679 = vpack.c.bf16 %v655, %v653
    %v680 = vpack.c.bf16 %v656, %v654
    %v681 = vpack.c.bf16 %v659, %v657
    %v682 = vpack.c.bf16 %v660, %v658
    %v683 = vpack.c.bf16 %v663, %v661
    %v684 = vpack.c.bf16 %v664, %v662
    %v685 = vpack.c.bf16 %v667, %v665
    %v686 = vpack.c.bf16 %v668, %v666
    %v687 = vpack.c.bf16 %v671, %v669
    %v688 = vpack.c.bf16 %v672, %v670
    %v705 = vunpack.c.l.b16 %v673
    %v706 = vunpack.c.l.b16 %v674
    %v707 = vunpack.c.h.b16 %v673
    %v708 = vunpack.c.h.b16 %v674
    %v709 = vunpack.c.l.b16 %v675
    %v710 = vunpack.c.l.b16 %v676
    %v711 = vunpack.c.h.b16 %v675
    %v712 = vunpack.c.h.b16 %v676
    %v713 = vunpack.c.l.b16 %v677
    %v714 = vunpack.c.l.b16 %v678
    %v715 = vunpack.c.h.b16 %v677
    %v716 = vunpack.c.h.b16 %v678
    %v717 = vunpack.c.l.b16 %v679
    %v718 = vunpack.c.l.b16 %v680
    %v719 = vunpack.c.h.b16 %v679
    %v720 = vunpack.c.h.b16 %v680
    %v721 = vunpack.c.l.b16 %v681
    %v722 = vunpack.c.l.b16 %v682
    %v723 = vunpack.c.h.b16 %v681
    %v724 = vunpack.c.h.b16 %v682
    %v725 = vunpack.c.l.b16 %v683
    %v726 = vunpack.c.l.b16 %v684
    %v727 = vunpack.c.h.b16 %v683
    %v728 = vunpack.c.h.b16 %v684
    %v729 = vunpack.c.l.b16 %v685
    %v730 = vunpack.c.l.b16 %v686
    %v731 = vunpack.c.h.b16 %v685
    %v732 = vunpack.c.h.b16 %v686
    %v733 = vunpack.c.l.b16 %v687
    %v734 = vunpack.c.l.b16 %v688
    %v735 = vunpack.c.h.b16 %v687
    %v736 = vunpack.c.h.b16 %v688
    %v737 = vpack.c.b16 %v706, %v705
    %v738 = vpack.c.b16 %v708, %v707
    %v739 = vpack.c.b16 %v710, %v709
    %v740 = vpack.c.b16 %v712, %v711
    %v741 = vpack.c.b16 %v714, %v713
    %v742 = vpack.c.b16 %v716, %v715
    %v743 = vpack.c.b16 %v718, %v717
    %v744 = vpack.c.b16 %v720, %v719
    %v745 = vpack.c.b16 %v722, %v721
    %v746 = vpack.c.b16 %v724, %v723
    %v747 = vpack.c.b16 %v726, %v725
    %v748 = vpack.c.b16 %v728, %v727
    %v749 = vpack.c.b16 %v730, %v729
    %v750 = vpack.c.b16 %v732, %v731
    %v751 = vpack.c.b16 %v734, %v733
    %v752 = vpack.c.b16 %v736, %v735
    %769 = vst [vmem:[#allocation11] sm:$0xff] %v737
    %770 = vst [vmem:[#allocation11 + $0x8] sm:$0xff] %v738
    %771 = vst [vmem:[#allocation11 + $0x10] sm:$0xff] %v739
    %772 = vst [vmem:[#allocation11 + $0x18] sm:$0xff] %v740
    %773 = vst [vmem:[#allocation11 + $0x20] sm:$0xff] %v741
    %774 = vst [vmem:[#allocation11 + $0x28] sm:$0xff] %v742
    %775 = vst [vmem:[#allocation11 + $0x30] sm:$0xff] %v743
    %776 = vst [vmem:[#allocation11 + $0x38] sm:$0xff] %v744
    %777 = vst [vmem:[#allocation11 + $0x40] sm:$0xff] %v745
    %778 = vst [vmem:[#allocation11 + $0x48] sm:$0xff] %v746
    %779 = vst [vmem:[#allocation11 + $0x50] sm:$0xff] %v747
    %780 = vst [vmem:[#allocation11 + $0x58] sm:$0xff] %v748
    %781 = vst [vmem:[#allocation11 + $0x60] sm:$0xff] %v749
    %782 = vst [vmem:[#allocation11 + $0x68] sm:$0xff] %v750
    %783 = vst [vmem:[#allocation11 + $0x70] sm:$0xff] %v751
    %784 = vst [vmem:[#allocation11 + $0x78] sm:$0xff] %v752
    // Predicated region
    $region42: #{tpu_custom_call.1} parent=1 // pred_check
      _
    $region43: #{tpu_custom_call.1} parent=1 // pred_check_branch
      %786 = sbr.rel (0) target = $region45
    $region44: #{tpu_custom_call.1} parent=1 // pred_region
      %s788 = ssub.s32 2048, 2048
      %789 = vsyncadd [#allocation5], %s788
      %s790 = sshll.u32 [#allocation11], 4
      %s791 = int_to_ptr.vmem [resolvable:$true] %s790
      %796 = dma.vmem_to_hbm [thread:$0]  %s791, 2048, %s6, [#allocation5], 128, 128, 8
    $region45: #{tpu_custom_call.1} parent=1 // pred_fallthru
      _
    // Predicated region
    $region46: #{tpu_custom_call.1} parent=1 // pred_check
      _
    $region47: #{tpu_custom_call.1} parent=1 // pred_check_branch
      %798 = sbr.rel (0) target = $region49
    $region48: #{tpu_custom_call.1} parent=1 // pred_region
      %799 = dma.done [#allocation5], 2048
    $region49: #{tpu_custom_call.1} parent=1 // pred_fallthru
      _
    %800 = vsyncpa [#allocation4], 1
    %801 = vsyncpa [#allocation7], 1
    %802 = vsyncpa [#allocation10], 1
    %803 = vsyncpa [#allocation5], 1

</llo_original>
